<compile_context>
chip_gen: v5e
topology: v5e:2x2
jax: 0.10.0
libtpu: 0.0.40
codegen_flags: <defaults>
</compile_context>

<pallas_src>
import math
import jax
import jax.numpy as jnp
from jax import lax
from jax.experimental import pallas as pl
from jax.experimental.pallas import tpu as pltpu

# ---- hyperparameters: MyCNN(4, 3, 2, 8, 3, 2), input length hard-coded 1331 ----
OC1, K1, S1 = 4, 3, 2
OC2, K2, S2 = 8, 3, 2
L_IN = 1331
B = 2

L1 = (L_IN + 2 * K1 - K1) // S1 + 1      # conv1 output length = 668
L2 = L1 // 2                             # AvgPool1d(2,2)      = 334
L3 = (L2 + 2 * K2 - K2) // S2 + 1        # conv2 output length = 169
F = OC2 * L3                             # flattened fc input  = 1352
NPHASE = 6                               # conv1 outputs feeding one conv2 position

# sanity check against the module's own out_lenth3 bookkeeping
_out1 = math.floor((L_IN + K1) / S1 + 1) * OC1
_out2 = math.floor(_out1 / 2)
_out3 = int(math.floor((_out2 / OC1 + K2) / S2 + 1) * OC2)
assert _out3 == F, (_out3, F)
assert L1 == 4 * (L3 - 2), (L1, L3)

_HI = jax.lax.Precision.HIGHEST


# --------------------------- fused Pallas kernel -----------------------------
#
# Index algebra (per sample):
#   conv1:  out1[oc, q] = relu(b1 + sum_t w1[oc,t] * xpad[2q + t]),  q in [0,668)
#   pool :  pooled[p]   = 0.5*(out1[2p] + out1[2p+1]),               p in [0,334)
#   conv2:  tap t of output j reads pooled_pad[2j + t] = pooled[2j + t - 3]
# For conv2 output j, the six conv1 outputs needed are q = 4j - 6 + r, r=0..5.
# The wrapper therefore ships patches p[r, t, j] = xpad[8j + 2r - 12 + t], so
# inside the kernel every quantity is indexed by the SAME lane index j and the
# pool + conv2-im2col become plain VPU adds (no strided access, no rolls).

def _mycnn_fused_kernel(p_ref, w1_ref, b1_ref, w2_ref, b2_ref, fw_ref, fb_ref, o_ref):
    # p_ref : (1, NPHASE, K1, L3)   phase-split conv1 patches of one sample
    # w1_ref: (OC1, K1)    b1_ref: (OC1, 1)
    # w2_ref: (OC2, OC1*K2)  (column = ci*K2 + t)    b2_ref: (OC2, 1)
    # fw_ref: (OC2, L3)    fb_ref: (1, 1)
    # o_ref : (1, 1, 1)
    w1 = w1_ref[...]
    b1 = b1_ref[...]

    # conv1 (stride 2) + ReLU for each of the six phases: 3 VPU FMAs each.
    def conv1_phase(r):
        patches = p_ref[0, r]                                  # (K1, L3)
        acc = w1[:, 0:1] * patches[0:1, :]
        for t in range(1, K1):
            acc = acc + w1[:, t:t + 1] * patches[t:t + 1, :]
        return jnp.maximum(acc + b1, 0.0)                      # (OC1, L3)

    d = [conv1_phase(r) for r in range(NPHASE)]

    # AvgPool1d(2,2) + conv2 tap gather: tap t at output j is the pooled pair
    # (phases 2t, 2t+1). Zero the lanes that fall into conv2's zero padding.
    j_idx = lax.broadcasted_iota(jnp.int32, (OC1, L3), 1)
    x_tap = []
    for t in range(K2):
        pooled = 0.5 * (d[2 * t] + d[2 * t + 1])               # (OC1, L3)
        lo = 2 if t == 0 else 1
        hi = L3 - 1 if t == 0 else L3 - 2
        valid = (j_idx >= lo) & (j_idx <= hi)
        x_tap.append(jnp.where(valid, pooled, 0.0))

    # conv2 (stride 2) + ReLU: 12 VPU FMAs on (OC2, L3).
    acc2 = jnp.zeros((OC2, L3), jnp.float32)
    w2 = w2_ref[...]
    for ci in range(OC1):
        for t in range(K2):
            k = ci * K2 + t
            acc2 = acc2 + w2[:, k:k + 1] * x_tap[t][ci:ci + 1, :]
    h2 = jnp.maximum(acc2 + b2_ref[...], 0.0)                  # (OC2, L3)

    # fc on the channel-major flatten: lane-dense weight, VPU mul + reduce.
    prod = h2 * fw_ref[...]                                    # (OC2, L3)
    total = jnp.sum(jnp.sum(prod, axis=1, keepdims=True), axis=0, keepdims=True)
    o_ref[...] = (total + fb_ref[...]).reshape(1, 1, 1)


# ------------------------------ wrapper ---------------------------------------

def mycnn_forward(x, params):
    w1, b1, w2, b2, fw, fb = params
    bsz = x.shape[0]

    # tiny XLA glue: conv1 padding + phase-split patch gather (~24 KB total)
    xpad = jnp.pad(x[:, 0, :], ((0, 0), (K1, K1)))             # (B, L_IN + 2*K1)
    j = jnp.arange(L3, dtype=jnp.int32)
    r = jnp.arange(NPHASE, dtype=jnp.int32)
    t = jnp.arange(K1, dtype=jnp.int32)
    idx = 8 * j[None, None, :] + 2 * r[:, None, None] + t[None, :, None] - 12
    idx = jnp.clip(idx, 0, xpad.shape[1] - 1)   # out-of-range phases masked in-kernel
    p1 = xpad[:, idx]                                          # (B, NPHASE, K1, L3)

    w1f = w1.reshape(OC1, K1)
    w2f = w2.reshape(OC2, OC1 * K2)        # column = ci*K2 + t
    fw2d = fw.reshape(OC2, L3)             # channel-major flatten layout

    out = pl.pallas_call(
        _mycnn_fused_kernel,
        out_shape=jax.ShapeDtypeStruct((bsz, 1, 1), jnp.float32),
        grid=(bsz,),
        in_specs=[
            pl.BlockSpec((1, NPHASE, K1, L3), lambda b: (b, 0, 0, 0)),
            pl.BlockSpec((OC1, K1), lambda b: (0, 0)),
            pl.BlockSpec((OC1, 1), lambda b: (0, 0)),
            pl.BlockSpec((OC2, OC1 * K2), lambda b: (0, 0)),
            pl.BlockSpec((OC2, 1), lambda b: (0, 0)),
            pl.BlockSpec((OC2, L3), lambda b: (0, 0)),
            pl.BlockSpec((1, 1), lambda b: (0, 0)),
        ],
        out_specs=pl.BlockSpec((1, 1, 1), lambda b: (b, 0, 0)),
        compiler_params=pltpu.CompilerParams(dimension_semantics=("parallel",)),
    )(p1, w1f, b1.reshape(OC1, 1), w2f, b2.reshape(OC2, 1), fw2d, fb.reshape(1, 1))
    return out.reshape(bsz, 1)


# -------------------------- reference (pure JAX) -----------------------------

def mycnn_reference(x, params):
    w1, b1, w2, b2, fw, fb = params
    dn = ("NCH", "OIH", "NCH")
    h = lax.conv_general_dilated(x, w1, window_strides=(S1,), padding=[(K1, K1)],
                                 dimension_numbers=dn, precision=_HI)
    h = jnp.maximum(h + b1[None, :, None], 0.0)
    h = h[:, :, : 2 * L2].reshape(h.shape[0], OC1, L2, 2).mean(axis=-1)
    h = lax.conv_general_dilated(h, w2, window_strides=(S2,), padding=[(K2, K2)],
                                 dimension_numbers=dn, precision=_HI)
    h = jnp.maximum(h + b2[None, :, None], 0.0)
    flat = h.reshape(h.shape[0], -1)
    return jnp.dot(flat, fw.T, precision=_HI) + fb[None, :]


# -------------------------- parameter init -----------------------------------

def init_params(key):
    k1, k2, k3, k4, k5, k6 = jax.random.split(key, 6)
    bnd1 = 1.0 / math.sqrt(1 * K1)
    w1 = jax.random.uniform(k1, (OC1, 1, K1), jnp.float32, -bnd1, bnd1)
    b1 = jax.random.uniform(k2, (OC1,), jnp.float32, -bnd1, bnd1)
    bnd2 = 1.0 / math.sqrt(OC1 * K2)
    w2 = jax.random.uniform(k3, (OC2, OC1, K2), jnp.float32, -bnd2, bnd2)
    b2 = jax.random.uniform(k4, (OC2,), jnp.float32, -bnd2, bnd2)
    bnd3 = 1.0 / math.sqrt(F)
    fw = jax.random.uniform(k5, (1, F), jnp.float32, -bnd3, bnd3)
    fb = jax.random.uniform(k6, (1,), jnp.float32, -bnd3, bnd3)
    return (w1, b1, w2, b2, fw, fb)


if __name__ == "__main__":
    key = jax.random.PRNGKey(0)
    pkey, xkey = jax.random.split(key)
    params = init_params(pkey)
    x = jax.random.normal(xkey, (B, 1, L_IN), jnp.float32)

    out = jax.jit(mycnn_forward)(x, params)
    out = jax.block_until_ready(out)

    ref = mycnn_reference(x, params)
    assert out.shape == (B, 1), out.shape
    assert jnp.allclose(out, ref, rtol=1e-3, atol=1e-3), (out, ref)
    print("KERNEL_OK")
</pallas_src>

<mosaic_0001>
module attributes {stable_mosaic.version = 11 : i64} {
  func.func @_mycnn_fused_kernel(%arg0: i32, %arg1: memref<1x6x3x169xf32, #tpu.memory_space<vmem>>, %arg2: memref<4x3xf32, #tpu.memory_space<vmem>>, %arg3: memref<4x1xf32, #tpu.memory_space<vmem>>, %arg4: memref<8x12xf32, #tpu.memory_space<vmem>>, %arg5: memref<8x1xf32, #tpu.memory_space<vmem>>, %arg6: memref<8x169xf32, #tpu.memory_space<vmem>>, %arg7: memref<1x1xf32, #tpu.memory_space<vmem>>, %arg8: memref<1x1x1xf32, #tpu.memory_space<vmem>>) attributes {dimension_semantics = [#tpu.dimension_semantics<parallel>], iteration_bounds = array<i64: 2>, scalar_prefetch = 0 : i64, scratch_operands = 0 : i64, tpu.core_type = #tpu.core_type<tc>, window_params = [{transform_indices = @transform_0, window_bounds = array<i64: 1, 6, 3, 169>}, {pipeline_mode = #tpu.pipeline_mode<synchronous>, transform_indices = @transform_1, window_bounds = array<i64: 4, 3>}, {pipeline_mode = #tpu.pipeline_mode<synchronous>, transform_indices = @transform_2, window_bounds = array<i64: 4, 1>}, {pipeline_mode = #tpu.pipeline_mode<synchronous>, transform_indices = @transform_3, window_bounds = array<i64: 8, 12>}, {pipeline_mode = #tpu.pipeline_mode<synchronous>, transform_indices = @transform_4, window_bounds = array<i64: 8, 1>}, {pipeline_mode = #tpu.pipeline_mode<synchronous>, transform_indices = @transform_5, window_bounds = array<i64: 8, 169>}, {pipeline_mode = #tpu.pipeline_mode<synchronous>, transform_indices = @transform_6, window_bounds = array<i64: 1, 1>}, {transform_indices = @transform_7, window_bounds = array<i64: 1, 1, 1>}]} {
    %c0 = arith.constant 0 : index
    %c0_0 = arith.constant 0 : index
    %0 = vector.load %arg2[%c0, %c0_0] : memref<4x3xf32, #tpu.memory_space<vmem>>, vector<4x3xf32>
    %c0_1 = arith.constant 0 : index
    %c0_2 = arith.constant 0 : index
    %1 = vector.load %arg3[%c0_1, %c0_2] : memref<4x1xf32, #tpu.memory_space<vmem>>, vector<4x1xf32>
    %c0_3 = arith.constant 0 : index
    %c0_4 = arith.constant 0 : index
    %c0_5 = arith.constant 0 : index
    %c0_6 = arith.constant 0 : index
    %2 = vector.load %arg1[%c0_3, %c0_4, %c0_5, %c0_6] : memref<1x6x3x169xf32, #tpu.memory_space<vmem>>, vector<1x1x3x169xf32>
    %3 = vector.shape_cast %2 : vector<1x1x3x169xf32> to vector<3x169xf32>
    %4 = vector.extract_strided_slice %0 {offsets = [0, 0], sizes = [4, 1], strides = [1, 1]} : vector<4x3xf32> to vector<4x1xf32>
    %5 = vector.extract_strided_slice %3 {offsets = [0, 0], sizes = [1, 169], strides = [1, 1]} : vector<3x169xf32> to vector<1x169xf32>
    %6 = vector.broadcast %4 : vector<4x1xf32> to vector<4x169xf32>
    %7 = vector.broadcast %5 : vector<1x169xf32> to vector<4x169xf32>
    %8 = arith.mulf %6, %7 : vector<4x169xf32>
    %9 = vector.extract_strided_slice %0 {offsets = [0, 1], sizes = [4, 1], strides = [1, 1]} : vector<4x3xf32> to vector<4x1xf32>
    %10 = vector.extract_strided_slice %3 {offsets = [1, 0], sizes = [1, 169], strides = [1, 1]} : vector<3x169xf32> to vector<1x169xf32>
    %11 = vector.broadcast %9 : vector<4x1xf32> to vector<4x169xf32>
    %12 = vector.broadcast %10 : vector<1x169xf32> to vector<4x169xf32>
    %13 = arith.mulf %11, %12 : vector<4x169xf32>
    %14 = arith.addf %8, %13 : vector<4x169xf32>
    %15 = vector.extract_strided_slice %0 {offsets = [0, 2], sizes = [4, 1], strides = [1, 1]} : vector<4x3xf32> to vector<4x1xf32>
    %16 = vector.extract_strided_slice %3 {offsets = [2, 0], sizes = [1, 169], strides = [1, 1]} : vector<3x169xf32> to vector<1x169xf32>
    %17 = vector.broadcast %15 : vector<4x1xf32> to vector<4x169xf32>
    %18 = vector.broadcast %16 : vector<1x169xf32> to vector<4x169xf32>
    %19 = arith.mulf %17, %18 : vector<4x169xf32>
    %20 = arith.addf %14, %19 : vector<4x169xf32>
    %21 = vector.broadcast %1 : vector<4x1xf32> to vector<4x169xf32>
    %22 = arith.addf %20, %21 : vector<4x169xf32>
    %cst = arith.constant 0.000000e+00 : f32
    %23 = vector.broadcast %cst : f32 to vector<4x169xf32>
    %24 = arith.maximumf %22, %23 : vector<4x169xf32>
    %c0_7 = arith.constant 0 : index
    %c1 = arith.constant 1 : index
    %c0_8 = arith.constant 0 : index
    %c0_9 = arith.constant 0 : index
    %25 = vector.load %arg1[%c0_7, %c1, %c0_8, %c0_9] : memref<1x6x3x169xf32, #tpu.memory_space<vmem>>, vector<1x1x3x169xf32>
    %26 = vector.shape_cast %25 : vector<1x1x3x169xf32> to vector<3x169xf32>
    %27 = vector.extract_strided_slice %0 {offsets = [0, 0], sizes = [4, 1], strides = [1, 1]} : vector<4x3xf32> to vector<4x1xf32>
    %28 = vector.extract_strided_slice %26 {offsets = [0, 0], sizes = [1, 169], strides = [1, 1]} : vector<3x169xf32> to vector<1x169xf32>
    %29 = vector.broadcast %27 : vector<4x1xf32> to vector<4x169xf32>
    %30 = vector.broadcast %28 : vector<1x169xf32> to vector<4x169xf32>
    %31 = arith.mulf %29, %30 : vector<4x169xf32>
    %32 = vector.extract_strided_slice %0 {offsets = [0, 1], sizes = [4, 1], strides = [1, 1]} : vector<4x3xf32> to vector<4x1xf32>
    %33 = vector.extract_strided_slice %26 {offsets = [1, 0], sizes = [1, 169], strides = [1, 1]} : vector<3x169xf32> to vector<1x169xf32>
    %34 = vector.broadcast %32 : vector<4x1xf32> to vector<4x169xf32>
    %35 = vector.broadcast %33 : vector<1x169xf32> to vector<4x169xf32>
    %36 = arith.mulf %34, %35 : vector<4x169xf32>
    %37 = arith.addf %31, %36 : vector<4x169xf32>
    %38 = vector.extract_strided_slice %0 {offsets = [0, 2], sizes = [4, 1], strides = [1, 1]} : vector<4x3xf32> to vector<4x1xf32>
    %39 = vector.extract_strided_slice %26 {offsets = [2, 0], sizes = [1, 169], strides = [1, 1]} : vector<3x169xf32> to vector<1x169xf32>
    %40 = vector.broadcast %38 : vector<4x1xf32> to vector<4x169xf32>
    %41 = vector.broadcast %39 : vector<1x169xf32> to vector<4x169xf32>
    %42 = arith.mulf %40, %41 : vector<4x169xf32>
    %43 = arith.addf %37, %42 : vector<4x169xf32>
    %44 = vector.broadcast %1 : vector<4x1xf32> to vector<4x169xf32>
    %45 = arith.addf %43, %44 : vector<4x169xf32>
    %cst_10 = arith.constant 0.000000e+00 : f32
    %46 = vector.broadcast %cst_10 : f32 to vector<4x169xf32>
    %47 = arith.maximumf %45, %46 : vector<4x169xf32>
    %c0_11 = arith.constant 0 : index
    %c2 = arith.constant 2 : index
    %c0_12 = arith.constant 0 : index
    %c0_13 = arith.constant 0 : index
    %48 = vector.load %arg1[%c0_11, %c2, %c0_12, %c0_13] : memref<1x6x3x169xf32, #tpu.memory_space<vmem>>, vector<1x1x3x169xf32>
    %49 = vector.shape_cast %48 : vector<1x1x3x169xf32> to vector<3x169xf32>
    %50 = vector.extract_strided_slice %0 {offsets = [0, 0], sizes = [4, 1], strides = [1, 1]} : vector<4x3xf32> to vector<4x1xf32>
    %51 = vector.extract_strided_slice %49 {offsets = [0, 0], sizes = [1, 169], strides = [1, 1]} : vector<3x169xf32> to vector<1x169xf32>
    %52 = vector.broadcast %50 : vector<4x1xf32> to vector<4x169xf32>
    %53 = vector.broadcast %51 : vector<1x169xf32> to vector<4x169xf32>
    %54 = arith.mulf %52, %53 : vector<4x169xf32>
    %55 = vector.extract_strided_slice %0 {offsets = [0, 1], sizes = [4, 1], strides = [1, 1]} : vector<4x3xf32> to vector<4x1xf32>
    %56 = vector.extract_strided_slice %49 {offsets = [1, 0], sizes = [1, 169], strides = [1, 1]} : vector<3x169xf32> to vector<1x169xf32>
    %57 = vector.broadcast %55 : vector<4x1xf32> to vector<4x169xf32>
    %58 = vector.broadcast %56 : vector<1x169xf32> to vector<4x169xf32>
    %59 = arith.mulf %57, %58 : vector<4x169xf32>
    %60 = arith.addf %54, %59 : vector<4x169xf32>
    %61 = vector.extract_strided_slice %0 {offsets = [0, 2], sizes = [4, 1], strides = [1, 1]} : vector<4x3xf32> to vector<4x1xf32>
    %62 = vector.extract_strided_slice %49 {offsets = [2, 0], sizes = [1, 169], strides = [1, 1]} : vector<3x169xf32> to vector<1x169xf32>
    %63 = vector.broadcast %61 : vector<4x1xf32> to vector<4x169xf32>
    %64 = vector.broadcast %62 : vector<1x169xf32> to vector<4x169xf32>
    %65 = arith.mulf %63, %64 : vector<4x169xf32>
    %66 = arith.addf %60, %65 : vector<4x169xf32>
    %67 = vector.broadcast %1 : vector<4x1xf32> to vector<4x169xf32>
    %68 = arith.addf %66, %67 : vector<4x169xf32>
    %cst_14 = arith.constant 0.000000e+00 : f32
    %69 = vector.broadcast %cst_14 : f32 to vector<4x169xf32>
    %70 = arith.maximumf %68, %69 : vector<4x169xf32>
    %c0_15 = arith.constant 0 : index
    %c3 = arith.constant 3 : index
    %c0_16 = arith.constant 0 : index
    %c0_17 = arith.constant 0 : index
    %71 = vector.load %arg1[%c0_15, %c3, %c0_16, %c0_17] : memref<1x6x3x169xf32, #tpu.memory_space<vmem>>, vector<1x1x3x169xf32>
    %72 = vector.shape_cast %71 : vector<1x1x3x169xf32> to vector<3x169xf32>
    %73 = vector.extract_strided_slice %0 {offsets = [0, 0], sizes = [4, 1], strides = [1, 1]} : vector<4x3xf32> to vector<4x1xf32>
    %74 = vector.extract_strided_slice %72 {offsets = [0, 0], sizes = [1, 169], strides = [1, 1]} : vector<3x169xf32> to vector<1x169xf32>
    %75 = vector.broadcast %73 : vector<4x1xf32> to vector<4x169xf32>
    %76 = vector.broadcast %74 : vector<1x169xf32> to vector<4x169xf32>
    %77 = arith.mulf %75, %76 : vector<4x169xf32>
    %78 = vector.extract_strided_slice %0 {offsets = [0, 1], sizes = [4, 1], strides = [1, 1]} : vector<4x3xf32> to vector<4x1xf32>
    %79 = vector.extract_strided_slice %72 {offsets = [1, 0], sizes = [1, 169], strides = [1, 1]} : vector<3x169xf32> to vector<1x169xf32>
    %80 = vector.broadcast %78 : vector<4x1xf32> to vector<4x169xf32>
    %81 = vector.broadcast %79 : vector<1x169xf32> to vector<4x169xf32>
    %82 = arith.mulf %80, %81 : vector<4x169xf32>
    %83 = arith.addf %77, %82 : vector<4x169xf32>
    %84 = vector.extract_strided_slice %0 {offsets = [0, 2], sizes = [4, 1], strides = [1, 1]} : vector<4x3xf32> to vector<4x1xf32>
    %85 = vector.extract_strided_slice %72 {offsets = [2, 0], sizes = [1, 169], strides = [1, 1]} : vector<3x169xf32> to vector<1x169xf32>
    %86 = vector.broadcast %84 : vector<4x1xf32> to vector<4x169xf32>
    %87 = vector.broadcast %85 : vector<1x169xf32> to vector<4x169xf32>
    %88 = arith.mulf %86, %87 : vector<4x169xf32>
    %89 = arith.addf %83, %88 : vector<4x169xf32>
    %90 = vector.broadcast %1 : vector<4x1xf32> to vector<4x169xf32>
    %91 = arith.addf %89, %90 : vector<4x169xf32>
    %cst_18 = arith.constant 0.000000e+00 : f32
    %92 = vector.broadcast %cst_18 : f32 to vector<4x169xf32>
    %93 = arith.maximumf %91, %92 : vector<4x169xf32>
    %c0_19 = arith.constant 0 : index
    %c4 = arith.constant 4 : index
    %c0_20 = arith.constant 0 : index
    %c0_21 = arith.constant 0 : index
    %94 = vector.load %arg1[%c0_19, %c4, %c0_20, %c0_21] : memref<1x6x3x169xf32, #tpu.memory_space<vmem>>, vector<1x1x3x169xf32>
    %95 = vector.shape_cast %94 : vector<1x1x3x169xf32> to vector<3x169xf32>
    %96 = vector.extract_strided_slice %0 {offsets = [0, 0], sizes = [4, 1], strides = [1, 1]} : vector<4x3xf32> to vector<4x1xf32>
    %97 = vector.extract_strided_slice %95 {offsets = [0, 0], sizes = [1, 169], strides = [1, 1]} : vector<3x169xf32> to vector<1x169xf32>
    %98 = vector.broadcast %96 : vector<4x1xf32> to vector<4x169xf32>
    %99 = vector.broadcast %97 : vector<1x169xf32> to vector<4x169xf32>
    %100 = arith.mulf %98, %99 : vector<4x169xf32>
    %101 = vector.extract_strided_slice %0 {offsets = [0, 1], sizes = [4, 1], strides = [1, 1]} : vector<4x3xf32> to vector<4x1xf32>
    %102 = vector.extract_strided_slice %95 {offsets = [1, 0], sizes = [1, 169], strides = [1, 1]} : vector<3x169xf32> to vector<1x169xf32>
    %103 = vector.broadcast %101 : vector<4x1xf32> to vector<4x169xf32>
    %104 = vector.broadcast %102 : vector<1x169xf32> to vector<4x169xf32>
    %105 = arith.mulf %103, %104 : vector<4x169xf32>
    %106 = arith.addf %100, %105 : vector<4x169xf32>
    %107 = vector.extract_strided_slice %0 {offsets = [0, 2], sizes = [4, 1], strides = [1, 1]} : vector<4x3xf32> to vector<4x1xf32>
    %108 = vector.extract_strided_slice %95 {offsets = [2, 0], sizes = [1, 169], strides = [1, 1]} : vector<3x169xf32> to vector<1x169xf32>
    %109 = vector.broadcast %107 : vector<4x1xf32> to vector<4x169xf32>
    %110 = vector.broadcast %108 : vector<1x169xf32> to vector<4x169xf32>
    %111 = arith.mulf %109, %110 : vector<4x169xf32>
    %112 = arith.addf %106, %111 : vector<4x169xf32>
    %113 = vector.broadcast %1 : vector<4x1xf32> to vector<4x169xf32>
    %114 = arith.addf %112, %113 : vector<4x169xf32>
    %cst_22 = arith.constant 0.000000e+00 : f32
    %115 = vector.broadcast %cst_22 : f32 to vector<4x169xf32>
    %116 = arith.maximumf %114, %115 : vector<4x169xf32>
    %c0_23 = arith.constant 0 : index
    %c5 = arith.constant 5 : index
    %c0_24 = arith.constant 0 : index
    %c0_25 = arith.constant 0 : index
    %117 = vector.load %arg1[%c0_23, %c5, %c0_24, %c0_25] : memref<1x6x3x169xf32, #tpu.memory_space<vmem>>, vector<1x1x3x169xf32>
    %118 = vector.shape_cast %117 : vector<1x1x3x169xf32> to vector<3x169xf32>
    %119 = vector.extract_strided_slice %0 {offsets = [0, 0], sizes = [4, 1], strides = [1, 1]} : vector<4x3xf32> to vector<4x1xf32>
    %120 = vector.extract_strided_slice %118 {offsets = [0, 0], sizes = [1, 169], strides = [1, 1]} : vector<3x169xf32> to vector<1x169xf32>
    %121 = vector.broadcast %119 : vector<4x1xf32> to vector<4x169xf32>
    %122 = vector.broadcast %120 : vector<1x169xf32> to vector<4x169xf32>
    %123 = arith.mulf %121, %122 : vector<4x169xf32>
    %124 = vector.extract_strided_slice %0 {offsets = [0, 1], sizes = [4, 1], strides = [1, 1]} : vector<4x3xf32> to vector<4x1xf32>
    %125 = vector.extract_strided_slice %118 {offsets = [1, 0], sizes = [1, 169], strides = [1, 1]} : vector<3x169xf32> to vector<1x169xf32>
    %126 = vector.broadcast %124 : vector<4x1xf32> to vector<4x169xf32>
    %127 = vector.broadcast %125 : vector<1x169xf32> to vector<4x169xf32>
    %128 = arith.mulf %126, %127 : vector<4x169xf32>
    %129 = arith.addf %123, %128 : vector<4x169xf32>
    %130 = vector.extract_strided_slice %0 {offsets = [0, 2], sizes = [4, 1], strides = [1, 1]} : vector<4x3xf32> to vector<4x1xf32>
    %131 = vector.extract_strided_slice %118 {offsets = [2, 0], sizes = [1, 169], strides = [1, 1]} : vector<3x169xf32> to vector<1x169xf32>
    %132 = vector.broadcast %130 : vector<4x1xf32> to vector<4x169xf32>
    %133 = vector.broadcast %131 : vector<1x169xf32> to vector<4x169xf32>
    %134 = arith.mulf %132, %133 : vector<4x169xf32>
    %135 = arith.addf %129, %134 : vector<4x169xf32>
    %136 = vector.broadcast %1 : vector<4x1xf32> to vector<4x169xf32>
    %137 = arith.addf %135, %136 : vector<4x169xf32>
    %cst_26 = arith.constant 0.000000e+00 : f32
    %138 = vector.broadcast %cst_26 : f32 to vector<4x169xf32>
    %139 = arith.maximumf %137, %138 : vector<4x169xf32>
    %140 = tpu.iota {dimensions = array<i32: 1>} : vector<4x169xi32>
    %141 = arith.addf %24, %47 : vector<4x169xf32>
    %cst_27 = arith.constant 5.000000e-01 : f32
    %142 = vector.broadcast %cst_27 : f32 to vector<4x169xf32>
    %143 = arith.mulf %142, %141 : vector<4x169xf32>
    %c2_i32 = arith.constant 2 : i32
    %144 = vector.broadcast %c2_i32 : i32 to vector<4x169xi32>
    %145 = arith.cmpi sge, %140, %144 : vector<4x169xi32>
    %c168_i32 = arith.constant 168 : i32
    %146 = vector.broadcast %c168_i32 : i32 to vector<4x169xi32>
    %147 = arith.cmpi sle, %140, %146 : vector<4x169xi32>
    %148 = arith.andi %145, %147 : vector<4x169xi1>
    %cst_28 = arith.constant 0.000000e+00 : f32
    %149 = vector.broadcast %cst_28 : f32 to vector<4x169xf32>
    %150 = arith.select %148, %143, %149 : vector<4x169xi1>, vector<4x169xf32>
    %151 = arith.addf %70, %93 : vector<4x169xf32>
    %cst_29 = arith.constant 5.000000e-01 : f32
    %152 = vector.broadcast %cst_29 : f32 to vector<4x169xf32>
    %153 = arith.mulf %152, %151 : vector<4x169xf32>
    %c1_i32 = arith.constant 1 : i32
    %154 = vector.broadcast %c1_i32 : i32 to vector<4x169xi32>
    %155 = arith.cmpi sge, %140, %154 : vector<4x169xi32>
    %c167_i32 = arith.constant 167 : i32
    %156 = vector.broadcast %c167_i32 : i32 to vector<4x169xi32>
    %157 = arith.cmpi sle, %140, %156 : vector<4x169xi32>
    %158 = arith.andi %155, %157 : vector<4x169xi1>
    %cst_30 = arith.constant 0.000000e+00 : f32
    %159 = vector.broadcast %cst_30 : f32 to vector<4x169xf32>
    %160 = arith.select %158, %153, %159 : vector<4x169xi1>, vector<4x169xf32>
    %161 = arith.addf %116, %139 : vector<4x169xf32>
    %cst_31 = arith.constant 5.000000e-01 : f32
    %162 = vector.broadcast %cst_31 : f32 to vector<4x169xf32>
    %163 = arith.mulf %162, %161 : vector<4x169xf32>
    %c1_i32_32 = arith.constant 1 : i32
    %164 = vector.broadcast %c1_i32_32 : i32 to vector<4x169xi32>
    %165 = arith.cmpi sge, %140, %164 : vector<4x169xi32>
    %c167_i32_33 = arith.constant 167 : i32
    %166 = vector.broadcast %c167_i32_33 : i32 to vector<4x169xi32>
    %167 = arith.cmpi sle, %140, %166 : vector<4x169xi32>
    %168 = arith.andi %165, %167 : vector<4x169xi1>
    %cst_34 = arith.constant 0.000000e+00 : f32
    %169 = vector.broadcast %cst_34 : f32 to vector<4x169xf32>
    %170 = arith.select %168, %163, %169 : vector<4x169xi1>, vector<4x169xf32>
    %cst_35 = arith.constant 0.000000e+00 : f32
    %171 = vector.broadcast %cst_35 : f32 to vector<8x169xf32>
    %c0_36 = arith.constant 0 : index
    %c0_37 = arith.constant 0 : index
    %172 = vector.load %arg4[%c0_36, %c0_37] : memref<8x12xf32, #tpu.memory_space<vmem>>, vector<8x12xf32>
    %173 = vector.extract_strided_slice %172 {offsets = [0, 0], sizes = [8, 1], strides = [1, 1]} : vector<8x12xf32> to vector<8x1xf32>
    %174 = vector.extract_strided_slice %150 {offsets = [0, 0], sizes = [1, 169], strides = [1, 1]} : vector<4x169xf32> to vector<1x169xf32>
    %175 = vector.broadcast %173 : vector<8x1xf32> to vector<8x169xf32>
    %176 = vector.broadcast %174 : vector<1x169xf32> to vector<8x169xf32>
    %177 = arith.mulf %175, %176 : vector<8x169xf32>
    %178 = arith.addf %171, %177 : vector<8x169xf32>
    %179 = vector.extract_strided_slice %172 {offsets = [0, 1], sizes = [8, 1], strides = [1, 1]} : vector<8x12xf32> to vector<8x1xf32>
    %180 = vector.extract_strided_slice %160 {offsets = [0, 0], sizes = [1, 169], strides = [1, 1]} : vector<4x169xf32> to vector<1x169xf32>
    %181 = vector.broadcast %179 : vector<8x1xf32> to vector<8x169xf32>
    %182 = vector.broadcast %180 : vector<1x169xf32> to vector<8x169xf32>
    %183 = arith.mulf %181, %182 : vector<8x169xf32>
    %184 = arith.addf %178, %183 : vector<8x169xf32>
    %185 = vector.extract_strided_slice %172 {offsets = [0, 2], sizes = [8, 1], strides = [1, 1]} : vector<8x12xf32> to vector<8x1xf32>
    %186 = vector.extract_strided_slice %170 {offsets = [0, 0], sizes = [1, 169], strides = [1, 1]} : vector<4x169xf32> to vector<1x169xf32>
    %187 = vector.broadcast %185 : vector<8x1xf32> to vector<8x169xf32>
    %188 = vector.broadcast %186 : vector<1x169xf32> to vector<8x169xf32>
    %189 = arith.mulf %187, %188 : vector<8x169xf32>
    %190 = arith.addf %184, %189 : vector<8x169xf32>
    %191 = vector.extract_strided_slice %172 {offsets = [0, 3], sizes = [8, 1], strides = [1, 1]} : vector<8x12xf32> to vector<8x1xf32>
    %192 = vector.extract_strided_slice %150 {offsets = [1, 0], sizes = [1, 169], strides = [1, 1]} : vector<4x169xf32> to vector<1x169xf32>
    %193 = vector.broadcast %191 : vector<8x1xf32> to vector<8x169xf32>
    %194 = vector.broadcast %192 : vector<1x169xf32> to vector<8x169xf32>
    %195 = arith.mulf %193, %194 : vector<8x169xf32>
    %196 = arith.addf %190, %195 : vector<8x169xf32>
    %197 = vector.extract_strided_slice %172 {offsets = [0, 4], sizes = [8, 1], strides = [1, 1]} : vector<8x12xf32> to vector<8x1xf32>
    %198 = vector.extract_strided_slice %160 {offsets = [1, 0], sizes = [1, 169], strides = [1, 1]} : vector<4x169xf32> to vector<1x169xf32>
    %199 = vector.broadcast %197 : vector<8x1xf32> to vector<8x169xf32>
    %200 = vector.broadcast %198 : vector<1x169xf32> to vector<8x169xf32>
    %201 = arith.mulf %199, %200 : vector<8x169xf32>
    %202 = arith.addf %196, %201 : vector<8x169xf32>
    %203 = vector.extract_strided_slice %172 {offsets = [0, 5], sizes = [8, 1], strides = [1, 1]} : vector<8x12xf32> to vector<8x1xf32>
    %204 = vector.extract_strided_slice %170 {offsets = [1, 0], sizes = [1, 169], strides = [1, 1]} : vector<4x169xf32> to vector<1x169xf32>
    %205 = vector.broadcast %203 : vector<8x1xf32> to vector<8x169xf32>
    %206 = vector.broadcast %204 : vector<1x169xf32> to vector<8x169xf32>
    %207 = arith.mulf %205, %206 : vector<8x169xf32>
    %208 = arith.addf %202, %207 : vector<8x169xf32>
    %209 = vector.extract_strided_slice %172 {offsets = [0, 6], sizes = [8, 1], strides = [1, 1]} : vector<8x12xf32> to vector<8x1xf32>
    %210 = vector.extract_strided_slice %150 {offsets = [2, 0], sizes = [1, 169], strides = [1, 1]} : vector<4x169xf32> to vector<1x169xf32>
    %211 = vector.broadcast %209 : vector<8x1xf32> to vector<8x169xf32>
    %212 = vector.broadcast %210 : vector<1x169xf32> to vector<8x169xf32>
    %213 = arith.mulf %211, %212 : vector<8x169xf32>
    %214 = arith.addf %208, %213 : vector<8x169xf32>
    %215 = vector.extract_strided_slice %172 {offsets = [0, 7], sizes = [8, 1], strides = [1, 1]} : vector<8x12xf32> to vector<8x1xf32>
    %216 = vector.extract_strided_slice %160 {offsets = [2, 0], sizes = [1, 169], strides = [1, 1]} : vector<4x169xf32> to vector<1x169xf32>
    %217 = vector.broadcast %215 : vector<8x1xf32> to vector<8x169xf32>
    %218 = vector.broadcast %216 : vector<1x169xf32> to vector<8x169xf32>
    %219 = arith.mulf %217, %218 : vector<8x169xf32>
    %220 = arith.addf %214, %219 : vector<8x169xf32>
    %221 = vector.extract_strided_slice %172 {offsets = [0, 8], sizes = [8, 1], strides = [1, 1]} : vector<8x12xf32> to vector<8x1xf32>
    %222 = vector.extract_strided_slice %170 {offsets = [2, 0], sizes = [1, 169], strides = [1, 1]} : vector<4x169xf32> to vector<1x169xf32>
    %223 = vector.broadcast %221 : vector<8x1xf32> to vector<8x169xf32>
    %224 = vector.broadcast %222 : vector<1x169xf32> to vector<8x169xf32>
    %225 = arith.mulf %223, %224 : vector<8x169xf32>
    %226 = arith.addf %220, %225 : vector<8x169xf32>
    %227 = vector.extract_strided_slice %172 {offsets = [0, 9], sizes = [8, 1], strides = [1, 1]} : vector<8x12xf32> to vector<8x1xf32>
    %228 = vector.extract_strided_slice %150 {offsets = [3, 0], sizes = [1, 169], strides = [1, 1]} : vector<4x169xf32> to vector<1x169xf32>
    %229 = vector.broadcast %227 : vector<8x1xf32> to vector<8x169xf32>
    %230 = vector.broadcast %228 : vector<1x169xf32> to vector<8x169xf32>
    %231 = arith.mulf %229, %230 : vector<8x169xf32>
    %232 = arith.addf %226, %231 : vector<8x169xf32>
    %233 = vector.extract_strided_slice %172 {offsets = [0, 10], sizes = [8, 1], strides = [1, 1]} : vector<8x12xf32> to vector<8x1xf32>
    %234 = vector.extract_strided_slice %160 {offsets = [3, 0], sizes = [1, 169], strides = [1, 1]} : vector<4x169xf32> to vector<1x169xf32>
    %235 = vector.broadcast %233 : vector<8x1xf32> to vector<8x169xf32>
    %236 = vector.broadcast %234 : vector<1x169xf32> to vector<8x169xf32>
    %237 = arith.mulf %235, %236 : vector<8x169xf32>
    %238 = arith.addf %232, %237 : vector<8x169xf32>
    %239 = vector.extract_strided_slice %172 {offsets = [0, 11], sizes = [8, 1], strides = [1, 1]} : vector<8x12xf32> to vector<8x1xf32>
    %240 = vector.extract_strided_slice %170 {offsets = [3, 0], sizes = [1, 169], strides = [1, 1]} : vector<4x169xf32> to vector<1x169xf32>
    %241 = vector.broadcast %239 : vector<8x1xf32> to vector<8x169xf32>
    %242 = vector.broadcast %240 : vector<1x169xf32> to vector<8x169xf32>
    %243 = arith.mulf %241, %242 : vector<8x169xf32>
    %244 = arith.addf %238, %243 : vector<8x169xf32>
    %c0_38 = arith.constant 0 : index
    %c0_39 = arith.constant 0 : index
    %245 = vector.load %arg5[%c0_38, %c0_39] : memref<8x1xf32, #tpu.memory_space<vmem>>, vector<8x1xf32>
    %246 = vector.broadcast %245 : vector<8x1xf32> to vector<8x169xf32>
    %247 = arith.addf %244, %246 : vector<8x169xf32>
    %cst_40 = arith.constant 0.000000e+00 : f32
    %248 = vector.broadcast %cst_40 : f32 to vector<8x169xf32>
    %249 = arith.maximumf %247, %248 : vector<8x169xf32>
    %c0_41 = arith.constant 0 : index
    %c0_42 = arith.constant 0 : index
    %250 = vector.load %arg6[%c0_41, %c0_42] : memref<8x169xf32, #tpu.memory_space<vmem>>, vector<8x169xf32>
    %251 = arith.mulf %249, %250 : vector<8x169xf32>
    %cst_43 = arith.constant dense<0.000000e+00> : vector<8xf32>
    %252 = vector.multi_reduction <add>, %251, %cst_43 [1] : vector<8x169xf32> to vector<8xf32>
    %253 = vector.shape_cast %252 : vector<8xf32> to vector<8x1xf32>
    %cst_44 = arith.constant dense<0.000000e+00> : vector<1xf32>
    %254 = vector.multi_reduction <add>, %253, %cst_44 [0] : vector<8x1xf32> to vector<1xf32>
    %255 = vector.shape_cast %254 : vector<1xf32> to vector<1x1xf32>
    %c0_45 = arith.constant 0 : index
    %c0_46 = arith.constant 0 : index
    %256 = vector.load %arg7[%c0_45, %c0_46] : memref<1x1xf32, #tpu.memory_space<vmem>>, vector<1x1xf32>
    %257 = arith.addf %255, %256 : vector<1x1xf32>
    %258 = vector.shape_cast %257 : vector<1x1xf32> to vector<1x1x1xf32>
    %c0_47 = arith.constant 0 : index
    %c0_48 = arith.constant 0 : index
    %c0_49 = arith.constant 0 : index
    %259 = vector.load %arg8[%c0_47, %c0_48, %c0_49] : memref<1x1x1xf32, #tpu.memory_space<vmem>>, vector<1x1x1xf32>
    tpu.vector_store %arg8[%c0_47, %c0_48, %c0_49], %258 {strides = array<i32>} : memref<1x1x1xf32, #tpu.memory_space<vmem>>, vector<1x1x1xf32>,
    return
  }
  func.func @transform_0(%arg0: i32) -> (i32, i32, i32, i32) {
    %c0_i32 = arith.constant 0 : i32
    %c0_i32_0 = arith.constant 0 : i32
    %c0_i32_1 = arith.constant 0 : i32
    %c0_i32_2 = arith.constant 0 : i32
    return %arg0, %c0_i32, %c0_i32_0, %c0_i32_1 : i32, i32, i32, i32
  }
  func.func @transform_1(%arg0: i32) -> (i32, i32) {
    %c0_i32 = arith.constant 0 : i32
    %c0_i32_0 = arith.constant 0 : i32
    %c0_i32_1 = arith.constant 0 : i32
    return %c0_i32, %c0_i32_0 : i32, i32
  }
  func.func @transform_2(%arg0: i32) -> (i32, i32) {
    %c0_i32 = arith.constant 0 : i32
    %c0_i32_0 = arith.constant 0 : i32
    %c0_i32_1 = arith.constant 0 : i32
    return %c0_i32, %c0_i32_0 : i32, i32
  }
  func.func @transform_3(%arg0: i32) -> (i32, i32) {
    %c0_i32 = arith.constant 0 : i32
    %c0_i32_0 = arith.constant 0 : i32
    %c0_i32_1 = arith.constant 0 : i32
    return %c0_i32, %c0_i32_0 : i32, i32
  }
  func.func @transform_4(%arg0: i32) -> (i32, i32) {
    %c0_i32 = arith.constant 0 : i32
    %c0_i32_0 = arith.constant 0 : i32
    %c0_i32_1 = arith.constant 0 : i32
    return %c0_i32, %c0_i32_0 : i32, i32
  }
  func.func @transform_5(%arg0: i32) -> (i32, i32) {
    %c0_i32 = arith.constant 0 : i32
    %c0_i32_0 = arith.constant 0 : i32
    %c0_i32_1 = arith.constant 0 : i32
    return %c0_i32, %c0_i32_0 : i32, i32
  }
  func.func @transform_6(%arg0: i32) -> (i32, i32) {
    %c0_i32 = arith.constant 0 : i32
    %c0_i32_0 = arith.constant 0 : i32
    %c0_i32_1 = arith.constant 0 : i32
    return %c0_i32, %c0_i32_0 : i32, i32
  }
  func.func @transform_7(%arg0: i32) -> (i32, i32, i32) {
    %c0_i32 = arith.constant 0 : i32
    %c0_i32_0 = arith.constant 0 : i32
    %c0_i32_1 = arith.constant 0 : i32
    return %arg0, %c0_i32, %c0_i32_0 : i32, i32, i32
  }
}

</mosaic_0001>

<llo_original>
// kernel: mycnn_forward.1
$region0: #{mycnn_forward.1}
  #allocation0 [shape = 'u32[]', space=smem, size = 0x4, offset = 0x4, fixed_abs, tag = 'smem constant byte address 0x4 - core index']
  #allocation1 [shape = 'u32[72,128]{1,0:T(1,128)}', space=vmem, size = 0x9000, scoped, tag = 'internal scratch']
  #allocation2 [shape = 'f32[1,1]{1,0:T(1,128)S(1)}', space=vmem, size = 0x200, scoped, tag = 'scoped memory for mycnn_forward.1']
  %s0 = inlined_call_operand.vmem [shape: f32[2,6,3,169], index: 0, kind: input, shape index: {}]
  %s1 = inlined_call_operand.vmem [shape: f32[4,3], index: 1, kind: input, shape index: {}]
  %s2 = inlined_call_operand.vmem [shape: f32[4,1], index: 2, kind: input, shape index: {}]
  %s3 = inlined_call_operand.vmem [shape: f32[8,12], index: 3, kind: input, shape index: {}]
  %s4 = inlined_call_operand.vmem [shape: f32[8,1], index: 4, kind: input, shape index: {}]
  %s5 = inlined_call_operand.vmem [shape: f32[8,169], index: 5, kind: input, shape index: {}]
  %s6 = inlined_call_operand.<no memory space> [shape: f32[1,1], index: 6, kind: input, shape index: {}]
  %s7 = inlined_call_operand.vmem [shape: f32[2,1,1], index: 7, kind: output, shape index: {}]
  %s8 = sld [smem:[#allocation0]]
  $region61: #{mycnn_forward.1} parent=0
    _
  %s10 = ssub.s32 1, %s8
  %s11 = scalar_select 0, %s10, %s8
  %v12 = vstv %s6
  %13 = vst [vmem:[#allocation2] sm:$0x1] %v12
  loop: start=0, step=1, limit=4
  $region2: #{mycnn_forward.1} parent=0 // loop_pre_header
    _
  $region3: #{mycnn_forward.1} parent=0 // loop_header
    %s15 = sphi 0, %s19
    %p16 = scmp.ge.s32.totalorder %s15, 4
    %s25 = sphi 0, %s27
    %s28 = sphi 0, %s25
    %s29 = sphi 0, %s28
    %s45 = sphi 0, %s29
    %s49 = sphi 0, %s49
    %s51 = sphi 0, %s49
    %s52 = sphi 0, %s51
    %s66 = sphi 0, %s52
    %s70 = sphi 0, %s70
    %s72 = sphi 0, %s70
    %s73 = sphi 0, %s72
    %s87 = sphi 0, %s73
    %s91 = sphi 0, %s91
    %s93 = sphi 0, %s91
    %s94 = sphi 0, %s93
    %s108 = sphi 0, %s94
    %s112 = sphi 0, %s112
    %s114 = sphi 0, %s112
    %s115 = sphi 0, %s114
    %s129 = sphi 0, %s115
    %s133 = sphi 0, %s133
    %s135 = sphi 0, %s133
    %s136 = sphi 0, %s135
    %s150 = sphi 0, %s136
    %s154 = sphi 0, %s154
    %s156 = sphi 0, %s154
    %s157 = sphi 0, %s156
    %s171 = sphi 0, %s157
    %s177 = sphi 0, %s179
    %s180 = sphi 0, %s177
    %s181 = sphi 0, %s180
    %s197 = sphi 0, %s181
  $region4: #{mycnn_forward.1} parent=0 // loop_header_branch
    %18 = sbr.rel (%p16) target = $region8
  $region5: #{mycnn_forward.1} parent=0 // loop_body
    %s20 = ssub.s32 %s15, 1
    %s21 = ssub.s32 %s15, 2
    %s22 = sadd.s32 %s15, 1
    %s23 = ssub.s32 %s15, %s22
    %p24 = scmp.eq.s32.totalorder %s23, 0
    %s26 = sadd.s32 %s25, 1
    %s27 = scalar_select %p24, %s25, %s26
    %p30 = pneg %p24
    %p31 = scmp.eq.s32.totalorder %s15, 1
    %p32 = por %p30, %p31
    %p33 = scmp.ne.s32.totalorder %s25, %s28
    %p34 = scmp.eq.s32.totalorder %s15, 0
    %p35 = por %p33, %p34
    %p36 = scmp.ne.s32.totalorder %s25, %s28
    %p37 = scmp.eq.s32.totalorder %s20, 1
    %p38 = por %p36, %p37
    %p39 = scmp.ne.s32.totalorder %s28, %s29
    %p40 = scmp.eq.s32.totalorder %s20, 0
    %p41 = por %p39, %p40
    %p42 = scmp.ne.s32.totalorder %s28, %s29
    %p43 = scmp.eq.s32.totalorder %s21, 1
    %p44 = por %p42, %p43
    %p46 = scmp.ne.s32.totalorder %s29, %s45
    %p47 = scmp.eq.s32.totalorder %s21, 0
    %p48 = por %p46, %p47
    %s50 = sadd.s32 %s49, 1
    %p53 = scmp.eq.s32.totalorder %s15, 1
    %p54 = scmp.ne.s32.totalorder %s49, %s51
    %p55 = scmp.eq.s32.totalorder %s15, 0
    %p56 = por %p54, %p55
    %p57 = scmp.ne.s32.totalorder %s49, %s51
    %p58 = scmp.eq.s32.totalorder %s20, 1
    %p59 = por %p57, %p58
    %p60 = scmp.ne.s32.totalorder %s51, %s52
    %p61 = scmp.eq.s32.totalorder %s20, 0
    %p62 = por %p60, %p61
    %p63 = scmp.ne.s32.totalorder %s51, %s52
    %p64 = scmp.eq.s32.totalorder %s21, 1
    %p65 = por %p63, %p64
    %p67 = scmp.ne.s32.totalorder %s52, %s66
    %p68 = scmp.eq.s32.totalorder %s21, 0
    %p69 = por %p67, %p68
    %s71 = sadd.s32 %s70, 1
    %p74 = scmp.eq.s32.totalorder %s15, 1
    %p75 = scmp.ne.s32.totalorder %s70, %s72
    %p76 = scmp.eq.s32.totalorder %s15, 0
    %p77 = por %p75, %p76
    %p78 = scmp.ne.s32.totalorder %s70, %s72
    %p79 = scmp.eq.s32.totalorder %s20, 1
    %p80 = por %p78, %p79
    %p81 = scmp.ne.s32.totalorder %s72, %s73
    %p82 = scmp.eq.s32.totalorder %s20, 0
    %p83 = por %p81, %p82
    %p84 = scmp.ne.s32.totalorder %s72, %s73
    %p85 = scmp.eq.s32.totalorder %s21, 1
    %p86 = por %p84, %p85
    %p88 = scmp.ne.s32.totalorder %s73, %s87
    %p89 = scmp.eq.s32.totalorder %s21, 0
    %p90 = por %p88, %p89
    %s92 = sadd.s32 %s91, 1
    %p95 = scmp.eq.s32.totalorder %s15, 1
    %p96 = scmp.ne.s32.totalorder %s91, %s93
    %p97 = scmp.eq.s32.totalorder %s15, 0
    %p98 = por %p96, %p97
    %p99 = scmp.ne.s32.totalorder %s91, %s93
    %p100 = scmp.eq.s32.totalorder %s20, 1
    %p101 = por %p99, %p100
    %p102 = scmp.ne.s32.totalorder %s93, %s94
    %p103 = scmp.eq.s32.totalorder %s20, 0
    %p104 = por %p102, %p103
    %p105 = scmp.ne.s32.totalorder %s93, %s94
    %p106 = scmp.eq.s32.totalorder %s21, 1
    %p107 = por %p105, %p106
    %p109 = scmp.ne.s32.totalorder %s94, %s108
    %p110 = scmp.eq.s32.totalorder %s21, 0
    %p111 = por %p109, %p110
    %s113 = sadd.s32 %s112, 1
    %p116 = scmp.eq.s32.totalorder %s15, 1
    %p117 = scmp.ne.s32.totalorder %s112, %s114
    %p118 = scmp.eq.s32.totalorder %s15, 0
    %p119 = por %p117, %p118
    %p120 = scmp.ne.s32.totalorder %s112, %s114
    %p121 = scmp.eq.s32.totalorder %s20, 1
    %p122 = por %p120, %p121
    %p123 = scmp.ne.s32.totalorder %s114, %s115
    %p124 = scmp.eq.s32.totalorder %s20, 0
    %p125 = por %p123, %p124
    %p126 = scmp.ne.s32.totalorder %s114, %s115
    %p127 = scmp.eq.s32.totalorder %s21, 1
    %p128 = por %p126, %p127
    %p130 = scmp.ne.s32.totalorder %s115, %s129
    %p131 = scmp.eq.s32.totalorder %s21, 0
    %p132 = por %p130, %p131
    %s134 = sadd.s32 %s133, 1
    %p137 = scmp.eq.s32.totalorder %s15, 1
    %p138 = scmp.ne.s32.totalorder %s133, %s135
    %p139 = scmp.eq.s32.totalorder %s15, 0
    %p140 = por %p138, %p139
    %p141 = scmp.ne.s32.totalorder %s133, %s135
    %p142 = scmp.eq.s32.totalorder %s20, 1
    %p143 = por %p141, %p142
    %p144 = scmp.ne.s32.totalorder %s135, %s136
    %p145 = scmp.eq.s32.totalorder %s20, 0
    %p146 = por %p144, %p145
    %p147 = scmp.ne.s32.totalorder %s135, %s136
    %p148 = scmp.eq.s32.totalorder %s21, 1
    %p149 = por %p147, %p148
    %p151 = scmp.ne.s32.totalorder %s136, %s150
    %p152 = scmp.eq.s32.totalorder %s21, 0
    %p153 = por %p151, %p152
    %s155 = sadd.s32 %s154, 1
    %p158 = scmp.eq.s32.totalorder %s15, 1
    %p159 = scmp.ne.s32.totalorder %s154, %s156
    %p160 = scmp.eq.s32.totalorder %s15, 0
    %p161 = por %p159, %p160
    %p162 = scmp.ne.s32.totalorder %s154, %s156
    %p163 = scmp.eq.s32.totalorder %s20, 1
    %p164 = por %p162, %p163
    %p165 = scmp.ne.s32.totalorder %s156, %s157
    %p166 = scmp.eq.s32.totalorder %s20, 0
    %p167 = por %p165, %p166
    %p168 = scmp.ne.s32.totalorder %s156, %s157
    %p169 = scmp.eq.s32.totalorder %s21, 1
    %p170 = por %p168, %p169
    %p172 = scmp.ne.s32.totalorder %s157, %s171
    %p173 = scmp.eq.s32.totalorder %s21, 0
    %p174 = por %p172, %p173
    %s175 = ssub.s32 %s15, %s22
    %p176 = scmp.eq.s32.totalorder %s175, 0
    %s178 = sadd.s32 %s177, 1
    %s179 = scalar_select %p176, %s177, %s178
    %p182 = pneg %p176
    %p183 = scmp.eq.s32.totalorder %s15, 1
    %p184 = por %p182, %p183
    %p185 = scmp.ne.s32.totalorder %s177, %s180
    %p186 = scmp.eq.s32.totalorder %s15, 0
    %p187 = por %p185, %p186
    %p188 = scmp.ne.s32.totalorder %s177, %s180
    %p189 = scmp.eq.s32.totalorder %s20, 1
    %p190 = por %p188, %p189
    %p191 = scmp.ne.s32.totalorder %s180, %s181
    %p192 = scmp.eq.s32.totalorder %s20, 0
    %p193 = por %p191, %p192
    %p194 = scmp.ne.s32.totalorder %s180, %s181
    %p195 = scmp.eq.s32.totalorder %s21, 1
    %p196 = por %p194, %p195
    %p198 = scmp.ne.s32.totalorder %s181, %s197
    %p199 = scmp.eq.s32.totalorder %s21, 0
    %p200 = por %p198, %p199
    %p201 = scmp.le.s32.totalorder 1, %s15
    %p202 = scmp.lt.s32.totalorder %s15, 3
    %p203 = pnand %p201, %p202
    %p204 = pneg %p203
    // Predicated region
    $region9: #{mycnn_forward.1} parent=5 // pred_check
      _
    $region10: #{mycnn_forward.1} parent=5 // pred_check_branch
      %206 = sbr.rel (%p203) target = $region12
    $region11: #{mycnn_forward.1} parent=5 // pred_region
      %s207 = ssub.s32 %s15, 1
      // Predicated region
      $region13: #{mycnn_forward.1} parent=11 // pred_check
        %p208 = pneg %p62
      $region14: #{mycnn_forward.1} parent=11 // pred_check_branch
        %210 = sbr.rel (%p208) target = $region16
      $region15: #{mycnn_forward.1} parent=11 // pred_region
        _
      $region16: #{mycnn_forward.1} parent=11 // pred_fallthru
        _
      // Predicated region
      $region17: #{mycnn_forward.1} parent=11 // pred_check
        %p211 = pneg %p83
      $region18: #{mycnn_forward.1} parent=11 // pred_check_branch
        %213 = sbr.rel (%p211) target = $region20
      $region19: #{mycnn_forward.1} parent=11 // pred_region
        _
      $region20: #{mycnn_forward.1} parent=11 // pred_fallthru
        _
      // Predicated region
      $region21: #{mycnn_forward.1} parent=11 // pred_check
        %p214 = pneg %p104
      $region22: #{mycnn_forward.1} parent=11 // pred_check_branch
        %216 = sbr.rel (%p214) target = $region24
      $region23: #{mycnn_forward.1} parent=11 // pred_region
        _
      $region24: #{mycnn_forward.1} parent=11 // pred_fallthru
        _
      // Predicated region
      $region25: #{mycnn_forward.1} parent=11 // pred_check
        %p217 = pneg %p125
      $region26: #{mycnn_forward.1} parent=11 // pred_check_branch
        %219 = sbr.rel (%p217) target = $region28
      $region27: #{mycnn_forward.1} parent=11 // pred_region
        _
      $region28: #{mycnn_forward.1} parent=11 // pred_fallthru
        _
      // Predicated region
      $region29: #{mycnn_forward.1} parent=11 // pred_check
        %p220 = pneg %p146
      $region30: #{mycnn_forward.1} parent=11 // pred_check_branch
        %222 = sbr.rel (%p220) target = $region32
      $region31: #{mycnn_forward.1} parent=11 // pred_region
        _
      $region32: #{mycnn_forward.1} parent=11 // pred_fallthru
        _
      // Predicated region
      $region33: #{mycnn_forward.1} parent=11 // pred_check
        %p223 = pneg %p167
      $region34: #{mycnn_forward.1} parent=11 // pred_check_branch
        %225 = sbr.rel (%p223) target = $region36
      $region35: #{mycnn_forward.1} parent=11 // pred_region
        _
      $region36: #{mycnn_forward.1} parent=11 // pred_fallthru
        _
    $region12: #{mycnn_forward.1} parent=5 // pred_fallthru
      _
    %p226 = scmp.lt.s32.totalorder %s15, 2
    // Predicated region
    $region37: #{mycnn_forward.1} parent=5 // pred_check
      %p227 = pneg %p226
    $region38: #{mycnn_forward.1} parent=5 // pred_check_branch
      %229 = sbr.rel (%p227) target = $region40
    $region39: #{mycnn_forward.1} parent=5 // pred_region
      // Predicated region
      $region41: #{mycnn_forward.1} parent=39 // pred_check
        %p230 = pneg %p35
      $region42: #{mycnn_forward.1} parent=39 // pred_check_branch
        %232 = sbr.rel (%p230) target = $region44
      $region43: #{mycnn_forward.1} parent=39 // pred_region
        %p233 = scmp.lt.s32.totalorder %s15, 1
        %s234 = scalar_select %p233, %s15, 1
        %s235 = smul.addr %s234, 12
        %s236 = smul.addr %s235, 4
        %s237 = scalar_lea.vmem %s0, %s236
      $region44: #{mycnn_forward.1} parent=39 // pred_fallthru
        _
    $region40: #{mycnn_forward.1} parent=5 // pred_fallthru
      _
    %p238 = scmp.le.s32.totalorder 1, %s15
    %p239 = scmp.lt.s32.totalorder %s15, 3
    %p240 = pnand %p238, %p239
    %p241 = pneg %p240
    // Predicated region
    $region45: #{mycnn_forward.1} parent=5 // pred_check
      _
    $region46: #{mycnn_forward.1} parent=5 // pred_check_branch
      %243 = sbr.rel (%p240) target = $region48
    $region47: #{mycnn_forward.1} parent=5 // pred_region
      %s244 = ssub.s32 %s15, 1
      %p245 = scmp.lt.s32.totalorder %s20, 1
      %s246 = scalar_select %p245, %s20, 1
      %s247 = smul.addr %s246, 12
      %s248 = smul.addr %s247, 4
      %s249 = scalar_lea.vmem %s0, %s248
      %p250 = pneg %p41
      %p251 = pneg %p38
      %p252 = pneg %p62
      %p253 = pneg %p59
      %p254 = pneg %p83
      %p255 = pneg %p80
      %p256 = pneg %p104
      %p257 = pneg %p101
      %p258 = pneg %p125
      %p259 = pneg %p122
      %p260 = pneg %p146
      %p261 = pneg %p143
      %p262 = pneg %p167
      %p263 = pneg %p164
      %p264 = pneg %p193
      %p265 = pneg %p190
      %p266 = scmp.lt.s32.totalorder %s20, 1
      %s267 = scalar_select %p266, %s20, 1
      %s268 = scalar_lea.vmem %s7, %s267
      %p269 = scmp.lt.s32.totalorder %s20, 1
      %s270 = scalar_select %p269, %s20, 1
      %s271 = smul.addr %s270, 12
      %s272 = smul.addr %s271, 4
      %s273 = scalar_lea.vmem %s0, %s272
      %p274 = scmp.lt.s32.totalorder %s20, 1
      %s275 = scalar_select %p274, %s20, 1
      %s276 = scalar_lea.vmem %s7, %s275
      %v277 = vld [vmem:[%s1] sm:$0xf]
      %v278 = vld [vmem:[%s2] sm:$0xf]
      %v279 = vld [vmem:[%s273] sm:$0x77]
      %281 = vset.pattern.permute.xlu0 0
      %282 = vperm.xlu0 %281, %v277
      %v283 = vpop.permute.xlu0 %282
      %v286 = vperm.slane %v279, 0
      %v287 = vperm.slane %v279, 4
      %v290 = vperm.slane %v286, 0
      %v291 = vperm.slane %v287, 0
      %v292 = vmul.f32 %v283, %v290
      %v293 = vmul.f32 %v283, %v291
      %294 = vset.pattern.permute.xlu0 1
      %295 = vperm.xlu0 %294, %v277
      %v296 = vpop.permute.xlu0 %295
      %v298 = vperm.slane %v279, 1
      %v299 = vperm.slane %v279, 5
      %v302 = vperm.slane %v298, 1
      %v303 = vperm.slane %v299, 1
      %v304 = vmul.f32 %v296, %v302
      %v305 = vmul.f32 %v296, %v303
      %v306 = vadd.f32 %v292, %v304
      %v307 = vadd.f32 %v293, %v305
      %308 = vset.pattern.permute.xlu0 2
      %309 = vperm.xlu0 %308, %v277
      %v310 = vpop.permute.xlu0 %309
      %v312 = vperm.slane %v279, 2
      %v313 = vperm.slane %v279, 6
      %v316 = vperm.slane %v312, 2
      %v317 = vperm.slane %v313, 2
      %v318 = vmul.f32 %v310, %v316
      %v319 = vmul.f32 %v310, %v317
      %v320 = vadd.f32 %v306, %v318
      %v321 = vadd.f32 %v307, %v319
      %323 = vset.pattern.permute.xlu0 0
      %324 = vperm.xlu0 %323, %v278
      %v325 = vpop.permute.xlu0 %324
      %v327 = vadd.f32 %v320, %v325
      %v328 = vadd.f32 %v321, %v325
      %v329 = vmax.f32 %v327, 0.0
      %v330 = vmax.f32 %v328, 0.0
      %s331 = scalar_lea.vmem %s273, 8
      %v332 = vld [vmem:[%s331] sm:$0x77]
      %v334 = vperm.slane %v332, 0
      %v335 = vperm.slane %v332, 4
      %v338 = vperm.slane %v334, 0
      %v339 = vperm.slane %v335, 0
      %v340 = vmul.f32 %v283, %v338
      %v341 = vmul.f32 %v283, %v339
      %v342 = vperm.slane %v332, 1
      %v343 = vperm.slane %v332, 5
      %v346 = vperm.slane %v342, 1
      %v347 = vperm.slane %v343, 1
      %v348 = vmul.f32 %v296, %v346
      %v349 = vmul.f32 %v296, %v347
      %v350 = vadd.f32 %v340, %v348
      %v351 = vadd.f32 %v341, %v349
      %v352 = vperm.slane %v332, 2
      %v353 = vperm.slane %v332, 6
      %v356 = vperm.slane %v352, 2
      %v357 = vperm.slane %v353, 2
      %v358 = vmul.f32 %v310, %v356
      %v359 = vmul.f32 %v310, %v357
      %v360 = vadd.f32 %v350, %v358
      %v361 = vadd.f32 %v351, %v359
      %v362 = vadd.f32 %v360, %v325
      %v363 = vadd.f32 %v361, %v325
      %v364 = vmax.f32 %v362, 0.0
      %v365 = vmax.f32 %v363, 0.0
      %s366 = scalar_lea.vmem %s273, 16
      %v367 = vld [vmem:[%s366] sm:$0x77]
      %v369 = vperm.slane %v367, 0
      %v370 = vperm.slane %v367, 4
      %v373 = vperm.slane %v369, 0
      %v374 = vperm.slane %v370, 0
      %v375 = vmul.f32 %v283, %v373
      %v376 = vmul.f32 %v283, %v374
      %v377 = vperm.slane %v367, 1
      %v378 = vperm.slane %v367, 5
      %v381 = vperm.slane %v377, 1
      %v382 = vperm.slane %v378, 1
      %v383 = vmul.f32 %v296, %v381
      %v384 = vmul.f32 %v296, %v382
      %v385 = vadd.f32 %v375, %v383
      %v386 = vadd.f32 %v376, %v384
      %v387 = vperm.slane %v367, 2
      %v388 = vperm.slane %v367, 6
      %v391 = vperm.slane %v387, 2
      %v392 = vperm.slane %v388, 2
      %v393 = vmul.f32 %v310, %v391
      %v394 = vmul.f32 %v310, %v392
      %v395 = vadd.f32 %v385, %v393
      %v396 = vadd.f32 %v386, %v394
      %v397 = vadd.f32 %v395, %v325
      %v398 = vadd.f32 %v396, %v325
      %v399 = vmax.f32 %v397, 0.0
      %v400 = vmax.f32 %v398, 0.0
      %s401 = scalar_lea.vmem %s273, 24
      %v402 = vld [vmem:[%s401] sm:$0x77]
      %v404 = vperm.slane %v402, 0
      %v405 = vperm.slane %v402, 4
      %v408 = vperm.slane %v404, 0
      %v409 = vperm.slane %v405, 0
      %v410 = vmul.f32 %v283, %v408
      %v411 = vmul.f32 %v283, %v409
      %v412 = vperm.slane %v402, 1
      %v413 = vperm.slane %v402, 5
      %v416 = vperm.slane %v412, 1
      %v417 = vperm.slane %v413, 1
      %v418 = vmul.f32 %v296, %v416
      %v419 = vmul.f32 %v296, %v417
      %v420 = vadd.f32 %v410, %v418
      %v421 = vadd.f32 %v411, %v419
      %v422 = vperm.slane %v402, 2
      %v423 = vperm.slane %v402, 6
      %v426 = vperm.slane %v422, 2
      %v427 = vperm.slane %v423, 2
      %v428 = vmul.f32 %v310, %v426
      %v429 = vmul.f32 %v310, %v427
      %v430 = vadd.f32 %v420, %v428
      %v431 = vadd.f32 %v421, %v429
      %v432 = vadd.f32 %v430, %v325
      %v433 = vadd.f32 %v431, %v325
      %v434 = vmax.f32 %v432, 0.0
      %v435 = vmax.f32 %v433, 0.0
      %s436 = scalar_lea.vmem %s273, 32
      %v437 = vld [vmem:[%s436] sm:$0x77]
      %v439 = vperm.slane %v437, 0
      %v440 = vperm.slane %v437, 4
      %v443 = vperm.slane %v439, 0
      %v444 = vperm.slane %v440, 0
      %v445 = vmul.f32 %v283, %v443
      %v446 = vmul.f32 %v283, %v444
      %v447 = vperm.slane %v437, 1
      %v448 = vperm.slane %v437, 5
      %v451 = vperm.slane %v447, 1
      %v452 = vperm.slane %v448, 1
      %v453 = vmul.f32 %v296, %v451
      %v454 = vmul.f32 %v296, %v452
      %v455 = vadd.f32 %v445, %v453
      %v456 = vadd.f32 %v446, %v454
      %v457 = vperm.slane %v437, 2
      %v458 = vperm.slane %v437, 6
      %v461 = vperm.slane %v457, 2
      %v462 = vperm.slane %v458, 2
      %v463 = vmul.f32 %v310, %v461
      %v464 = vmul.f32 %v310, %v462
      %v465 = vadd.f32 %v455, %v463
      %v466 = vadd.f32 %v456, %v464
      %v467 = vadd.f32 %v465, %v325
      %v468 = vadd.f32 %v466, %v325
      %v469 = vmax.f32 %v467, 0.0
      %v470 = vmax.f32 %v468, 0.0
      %s471 = scalar_lea.vmem %s273, 40
      %v472 = vld [vmem:[%s471] sm:$0x77]
      %v474 = vperm.slane %v472, 0
      %v475 = vperm.slane %v472, 4
      %v478 = vperm.slane %v474, 0
      %v479 = vperm.slane %v475, 0
      %v480 = vmul.f32 %v283, %v478
      %v481 = vmul.f32 %v283, %v479
      %v482 = vperm.slane %v472, 1
      %v483 = vperm.slane %v472, 5
      %v486 = vperm.slane %v482, 1
      %v487 = vperm.slane %v483, 1
      %v488 = vmul.f32 %v296, %v486
      %v489 = vmul.f32 %v296, %v487
      %v490 = vadd.f32 %v480, %v488
      %v491 = vadd.f32 %v481, %v489
      %v492 = vperm.slane %v472, 2
      %v493 = vperm.slane %v472, 6
      %v496 = vperm.slane %v492, 2
      %v497 = vperm.slane %v493, 2
      %v498 = vmul.f32 %v310, %v496
      %v499 = vmul.f32 %v310, %v497
      %v500 = vadd.f32 %v490, %v498
      %v501 = vadd.f32 %v491, %v499
      %v502 = vadd.f32 %v500, %v325
      %v503 = vadd.f32 %v501, %v325
      %v504 = vmax.f32 %v502, 0.0
      %v505 = vmax.f32 %v503, 0.0
      %v506 = vlaneseq
      %v507 = vand.u32 %v506, 127
      %v508 = vadd.s32 %v507, 128
      %v509 = vadd.f32 %v329, %v364
      %v510 = vadd.f32 %v330, %v365
      %v511 = vmul.f32 %v509, 0.5
      %v512 = vmul.f32 %v510, 0.5
      %vm513 = vcmp.ge.s32.totalorder %v507, 2
      %vm514 = vcmp.ge.s32.totalorder %v508, 2
      %vm515 = vcmp.le.s32.totalorder %v507, 168
      %vm516 = vcmp.le.s32.totalorder %v508, 168
      %vm517 = vmand %vm513, %vm515
      %vm518 = vmand %vm514, %vm516
      %v519 = vsel %vm517, %v511, 0.0
      %v520 = vsel %vm518, %v512, 0.0
      %v521 = vadd.f32 %v399, %v434
      %v522 = vadd.f32 %v400, %v435
      %v523 = vmul.f32 %v521, 0.5
      %v524 = vmul.f32 %v522, 0.5
      %vm525 = vcmp.ge.s32.totalorder %v507, 1
      %vm526 = vcmp.ge.s32.totalorder %v508, 1
      %vm527 = vcmp.le.s32.totalorder %v507, 167
      %vm528 = vcmp.le.s32.totalorder %v508, 167
      %vm529 = vmand %vm525, %vm527
      %vm530 = vmand %vm526, %vm528
      %v531 = vsel %vm529, %v523, 0.0
      %v532 = vsel %vm530, %v524, 0.0
      %v533 = vadd.f32 %v469, %v504
      %v534 = vadd.f32 %v470, %v505
      %v535 = vmul.f32 %v533, 0.5
      %v536 = vmul.f32 %v534, 0.5
      %v537 = vsel %vm529, %v535, 0.0
      %v538 = vsel %vm530, %v536, 0.0
      %v539 = vld [vmem:[%s3] sm:$0xff]
      %541 = vset.pattern.permute.xlu0 0
      %542 = vperm.xlu0 %541, %v539
      %v543 = vpop.permute.xlu0 %542
      %v545 = vperm.slane %v519, 0
      %v546 = vperm.slane %v520, 0
      %v547 = vmul.f32 %v543, %v545
      %v548 = vmul.f32 %v543, %v546
      %v549 = vadd.f32 %v547, 0.0
      %v550 = vadd.f32 %v548, 0.0
      %551 = vset.pattern.permute.xlu0 1
      %552 = vperm.xlu0 %551, %v539
      %v553 = vpop.permute.xlu0 %552
      %v555 = vperm.slane %v531, 0
      %v556 = vperm.slane %v532, 0
      %v557 = vmul.f32 %v553, %v555
      %v558 = vmul.f32 %v553, %v556
      %v559 = vadd.f32 %v549, %v557
      %v560 = vadd.f32 %v550, %v558
      %561 = vset.pattern.permute.xlu0 2
      %562 = vperm.xlu0 %561, %v539
      %v563 = vpop.permute.xlu0 %562
      %v565 = vperm.slane %v537, 0
      %v566 = vperm.slane %v538, 0
      %v567 = vmul.f32 %v563, %v565
      %v568 = vmul.f32 %v563, %v566
      %v569 = vadd.f32 %v559, %v567
      %v570 = vadd.f32 %v560, %v568
      %571 = vset.pattern.permute.xlu0 3
      %572 = vperm.xlu0 %571, %v539
      %v573 = vpop.permute.xlu0 %572
      %v575 = vperm.slane %v519, 1
      %v576 = vperm.slane %v520, 1
      %v577 = vmul.f32 %v573, %v575
      %v578 = vmul.f32 %v573, %v576
      %v579 = vadd.f32 %v569, %v577
      %v580 = vadd.f32 %v570, %v578
      %581 = vset.pattern.permute.xlu0 4
      %582 = vperm.xlu0 %581, %v539
      %v583 = vpop.permute.xlu0 %582
      %v585 = vperm.slane %v531, 1
      %v586 = vperm.slane %v532, 1
      %v587 = vmul.f32 %v583, %v585
      %v588 = vmul.f32 %v583, %v586
      %v589 = vadd.f32 %v579, %v587
      %v590 = vadd.f32 %v580, %v588
      %591 = vset.pattern.permute.xlu0 5
      %592 = vperm.xlu0 %591, %v539
      %v593 = vpop.permute.xlu0 %592
      %v595 = vperm.slane %v537, 1
      %v596 = vperm.slane %v538, 1
      %v597 = vmul.f32 %v593, %v595
      %v598 = vmul.f32 %v593, %v596
      %v599 = vadd.f32 %v589, %v597
      %v600 = vadd.f32 %v590, %v598
      %601 = vset.pattern.permute.xlu0 6
      %602 = vperm.xlu0 %601, %v539
      %v603 = vpop.permute.xlu0 %602
      %v605 = vperm.slane %v519, 2
      %v606 = vperm.slane %v520, 2
      %v607 = vmul.f32 %v603, %v605
      %v608 = vmul.f32 %v603, %v606
      %v609 = vadd.f32 %v599, %v607
      %v610 = vadd.f32 %v600, %v608
      %611 = vset.pattern.permute.xlu0 7
      %612 = vperm.xlu0 %611, %v539
      %v613 = vpop.permute.xlu0 %612
      %v615 = vperm.slane %v531, 2
      %v616 = vperm.slane %v532, 2
      %v617 = vmul.f32 %v613, %v615
      %v618 = vmul.f32 %v613, %v616
      %v619 = vadd.f32 %v609, %v617
      %v620 = vadd.f32 %v610, %v618
      %621 = vset.pattern.permute.xlu0 8
      %622 = vperm.xlu0 %621, %v539
      %v623 = vpop.permute.xlu0 %622
      %v625 = vperm.slane %v537, 2
      %v626 = vperm.slane %v538, 2
      %v627 = vmul.f32 %v623, %v625
      %v628 = vmul.f32 %v623, %v626
      %v629 = vadd.f32 %v619, %v627
      %v630 = vadd.f32 %v620, %v628
      %631 = vset.pattern.permute.xlu0 9
      %632 = vperm.xlu0 %631, %v539
      %v633 = vpop.permute.xlu0 %632
      %v635 = vperm.slane %v519, 3
      %v636 = vperm.slane %v520, 3
      %v637 = vmul.f32 %v633, %v635
      %v638 = vmul.f32 %v633, %v636
      %v639 = vadd.f32 %v629, %v637
      %v640 = vadd.f32 %v630, %v638
      %641 = vset.pattern.permute.xlu0 10
      %642 = vperm.xlu0 %641, %v539
      %v643 = vpop.permute.xlu0 %642
      %v645 = vperm.slane %v531, 3
      %v646 = vperm.slane %v532, 3
      %v647 = vmul.f32 %v643, %v645
      %v648 = vmul.f32 %v643, %v646
      %v649 = vadd.f32 %v639, %v647
      %v650 = vadd.f32 %v640, %v648
      %651 = vset.pattern.permute.xlu0 11
      %652 = vperm.xlu0 %651, %v539
      %v653 = vpop.permute.xlu0 %652
      %v655 = vperm.slane %v537, 3
      %v656 = vperm.slane %v538, 3
      %v657 = vmul.f32 %v653, %v655
      %v658 = vmul.f32 %v653, %v656
      %v659 = vadd.f32 %v649, %v657
      %v660 = vadd.f32 %v650, %v658
      %v661 = vld [vmem:[%s4] sm:$0xff]
      %663 = vset.pattern.permute.xlu0 0
      %664 = vperm.xlu0 %663, %v661
      %v665 = vpop.permute.xlu0 %664
      %v667 = vadd.f32 %v659, %v665
      %v668 = vadd.f32 %v660, %v665
      %v669 = vmax.f32 %v667, 0.0
      %v670 = vmax.f32 %v668, 0.0
      %v671 = vld [vmem:[%s5] sm:$0xff]
      %v672 = vld [vmem:[%s5 + $0x8] sm:$0xff]
      %v673 = vmul.f32 %v669, %v671
      %v674 = vmul.f32 %v670, %v672
      %vm675 = vcmask 334848
      %v676 = vsel %vm675, %v674, 0.0
      %v677 = vadd.f32 %v673, %v676
      %678 = vadd.xlane.f32.xlu0 %v677
      %v679 = vpop.xlane.xlu0 %678
      %v680 = vrot.slane %v679, 4
      %v681 = vadd.f32 %v679, %v680
      %v682 = vrot.slane %v681, 2
      %v683 = vadd.f32 %v681, %v682
      %v684 = vrot.slane %v683, 1
      %v685 = vadd.f32 %v683, %v684
      %v686 = vld [vmem:[#allocation2] sm:$0x1]
      %v687 = vadd.f32 %v685, %v686
      %vm688 = vcmask 0
      %689 = vst.msk [vmem:[%s276] sm:$0x1] %vm688, %v687
      %p690 = scmp.lt.s32.totalorder %s20, 1
      %s691 = scalar_select %p690, %s20, 1
      %s692 = scalar_lea.vmem %s7, %s691
      // Predicated region
      $region49: #{mycnn_forward.1} parent=47 // pred_check
        %p693 = pneg %p190
      $region50: #{mycnn_forward.1} parent=47 // pred_check_branch
        %695 = sbr.rel (%p693) target = $region52
      $region51: #{mycnn_forward.1} parent=47 // pred_region
        _
      $region52: #{mycnn_forward.1} parent=47 // pred_fallthru
        _
    $region48: #{mycnn_forward.1} parent=5 // pred_fallthru
      _
    %p696 = scmp.le.s32.totalorder 2, %s15
    // Predicated region
    $region53: #{mycnn_forward.1} parent=5 // pred_check
      %p697 = pneg %p696
    $region54: #{mycnn_forward.1} parent=5 // pred_check_branch
      %699 = sbr.rel (%p697) target = $region56
    $region55: #{mycnn_forward.1} parent=5 // pred_region
      %s700 = ssub.s32 %s15, 2
      // Predicated region
      $region57: #{mycnn_forward.1} parent=55 // pred_check
        %p701 = pneg %p196
      $region58: #{mycnn_forward.1} parent=55 // pred_check_branch
        %703 = sbr.rel (%p701) target = $region60
      $region59: #{mycnn_forward.1} parent=55 // pred_region
        %p704 = scmp.lt.s32.totalorder %s21, 1
        %s705 = scalar_select %p704, %s21, 1
        %s706 = scalar_lea.vmem %s7, %s705
      $region60: #{mycnn_forward.1} parent=55 // pred_fallthru
        _
    $region56: #{mycnn_forward.1} parent=5 // pred_fallthru
      _
  $region6: #{mycnn_forward.1} parent=0 // loop_footer
    %s19 = sadd.s32 1, %s15
  $region7: #{mycnn_forward.1} parent=0 // loop_footer_branch
    %14 = sbr.rel target = $region3
  $region8: #{mycnn_forward.1} parent=0 // loop_exit
    _

</llo_original>
